<compile_context>
chip_gen: v7x
topology: tpu7x:2x2x1
jax: 0.10.0
libtpu: 0.0.40
codegen_flags: <defaults>
</compile_context>

<pallas_src>
import functools

import jax
import jax.numpy as jnp
from jax.experimental import pallas as pl
from jax.experimental.pallas import tpu as pltpu


# ---------------------------------------------------------------------------
# Kernel
# ---------------------------------------------------------------------------
def _fourier_kernel(x_ref, o_ref, *, embed_dim: int, use_recurrence: bool,
                    anchor_every: int):
    # x_ref: (BR, LW) lane-dense tile of the flattened input.
    # o_ref: (P, BR, LW) parts-major output tile, P = 1 + 2*embed_dim.
    x = x_ref[...].astype(jnp.float32)
    o_ref[0] = x.astype(o_ref.dtype)

    if embed_dim > 0:
        s = jnp.sin(x)
        c = jnp.cos(x)
        o_ref[1] = s.astype(o_ref.dtype)
        o_ref[2] = c.astype(o_ref.dtype)
        for i in range(1, embed_dim):
            exact = (not use_recurrence) or (anchor_every > 0 and i % anchor_every == 0)
            if exact:
                t = (2.0 ** i) * x
                s = jnp.sin(t)
                c = jnp.cos(t)
            else:
                # angle doubling; (c - s)(c + s) is more accurate than 1 - 2 s^2 near |s|~1
                s, c = 2.0 * s * c, (c - s) * (c + s)
            o_ref[2 * i + 1] = s.astype(o_ref.dtype)
            o_ref[2 * i + 2] = c.astype(o_ref.dtype)


# ---------------------------------------------------------------------------
# Layout / VMEM planning
# ---------------------------------------------------------------------------
def _vmem_capacity_bytes() -> int:
    try:
        info = pltpu.get_tpu_info()
        cap = getattr(info, "vmem_capacity_bytes", None)
        if cap:
            return int(cap)
    except Exception:
        pass
    return 64 * 1024 * 1024  # conservative: v7x per-TensorCore VMEM


def _pick_layout(m: int, n_parts: int, in_itemsize: int, out_itemsize: int,
                 target_block_elems: int):
    """Pick a lane-dense (R, LW) view of the m flattened elements, a row-block BR that
    fits VMEM (double-buffered), and a matching vmem_limit_bytes.

    Returns (lw, pad, r, br, vmem_limit_bytes).
    """
    # Prefer sample-aligned widths (multiples of 3*128); then any 128-multiple divisor.
    sample_aligned = (3072, 1536, 768, 384)
    other = (2048, 1024, 512, 256, 128)
    divisors = [w for w in sample_aligned + other if m % w == 0]

    lw = None
    for cand in sorted(divisors, reverse=True):
        if m // cand >= 8:
            lw = cand
            break
    if lw is None and divisors:
        lw = min(divisors)

    pad = 0
    if lw is None:
        lw = 384                    # 3*128: padded rows hold whole samples -> cheap crop
        pad = (-m) % lw
    r = (m + pad) // lw

    # Sublane alignment for non-full row blocks (packed dtypes need 16/32-row tiles).
    if out_itemsize >= 4:
        align = 8
    elif out_itemsize == 2:
        align = 16
    else:
        align = 32

    # VMEM per block row: double-buffered input + double-buffered output + ~3 f32 temps.
    per_row = lw * (2 * in_itemsize + 2 * n_parts * out_itemsize + 3 * 4)
    vmem_cap = _vmem_capacity_bytes()
    budget = int(0.45 * vmem_cap)
    max_br_vmem = max(align, budget // per_row)

    br = max(1, min(r, max(1, target_block_elems // lw), max_br_vmem))
    if br < r:
        br = max(align, (br // align) * align)
        br = min(br, r)

    # Keep >=2 grid steps when possible so both v7x TensorCores get work.
    if br >= r and r >= 2 * align:
        half_aligned = ((-(-r // 2) + align - 1) // align) * align
        if half_aligned < r:
            br = half_aligned

    used_vmem = br * per_row + (1 << 20)
    vmem_limit = int(min(0.9 * vmem_cap, max(used_vmem * 3 // 2, 16 << 20)))
    return lw, pad, r, br, vmem_limit


# ---------------------------------------------------------------------------
# Wrapper
# ---------------------------------------------------------------------------
@functools.partial(jax.jit, static_argnums=(1, 2, 3, 4, 5, 6))
def _fourier_embed_impl(x, embed_dim, out_dtype_str, use_recurrence, anchor_every,
                        block_elems, interleave):
    nrays, nsamples, ch = x.shape
    assert ch == 3, "FourierEmbedder expects last dim == 3"
    n = nrays * nsamples
    m = n * ch
    n_parts = 1 + 2 * embed_dim
    out_dt = jnp.dtype(out_dtype_str)

    lw, pad, r, br, vmem_limit = _pick_layout(
        m, n_parts, jnp.dtype(x.dtype).itemsize, out_dt.itemsize, block_elems)

    xf = x.reshape(m)
    if pad:
        xf = jnp.pad(xf, (0, pad))
    x2d = xf.reshape(r, lw)

    kernel = functools.partial(_fourier_kernel, embed_dim=embed_dim,
                               use_recurrence=use_recurrence,
                               anchor_every=anchor_every)

    out_parts = pl.pallas_call(
        kernel,
        out_shape=jax.ShapeDtypeStruct((n_parts, r, lw), out_dt),
        grid_spec=pltpu.PrefetchScalarGridSpec(
            num_scalar_prefetch=0,
            grid=(pl.cdiv(r, br),),
            in_specs=[pl.BlockSpec((br, lw), lambda i: (i, 0))],
            out_specs=pl.BlockSpec((n_parts, br, lw), lambda i: (0, i, 0)),
        ),
        compiler_params=pltpu.CompilerParams(
            dimension_semantics=("parallel",),
            vmem_limit_bytes=vmem_limit),
    )(x2d)

    # r*lw is always divisible by 3 (either m == 3*n with no pad, or lw is a 384-multiple).
    n_padded = (r * lw) // ch
    out_parts = out_parts.reshape(n_parts, n_padded, ch)

    if not interleave:
        # Parts-major fast path (review's "fold permutation into consumer"): no extra pass.
        if pad:
            out_parts = out_parts[:, :n, :]
        return out_parts.reshape(n_parts, nrays, nsamples, ch)

    # Restore exact torch.cat ordering: (P, Npad, 3) -> (Npad, P, 3) -> crop -> final.
    out = out_parts.transpose(1, 0, 2)
    if pad:
        out = out[:n]          # leading-dim slice (cheap), deferred until after transpose
    return out.reshape(nrays, nsamples, n_parts * ch)


def fourier_embed(x: jax.Array, embed_dim: int, fourier: bool = True, *,
                  out_dtype=None, use_recurrence: bool = True, anchor_every: int = 4,
                  block_elems: int = 1 << 18, interleave: bool = True) -> jax.Array:
    """Pallas TPU implementation of FourierEmbedder.forward.

    x: (nrays, nsamples, 3). Returns (nrays, nsamples, 3*(1+2*embed_dim)) if fourier,
    else x unchanged.

    Perf knobs:
      out_dtype=bfloat16 halves the dominant HBM write traffic (compute stays f32); note
        that part 0 (the raw x copy) is then also bf16, unlike torch's exact copy.
      interleave=False returns the parts-major (P, nrays, nsamples, 3) layout with zero
        extra passes; the interleave permutation can then be folded into the consumer
        (e.g. permute the first MLP weight rows offline).
    """
    if not fourier:
        return x
    out_dt = jnp.dtype(x.dtype if out_dtype is None else out_dtype)
    return _fourier_embed_impl(x, int(embed_dim), str(out_dt), bool(use_recurrence),
                               int(anchor_every), int(block_elems), bool(interleave))


def fourier_embed_ref(x: jax.Array, embed_dim: int, fourier: bool = True) -> jax.Array:
    """Pure-JAX reference mirroring the PyTorch module."""
    if not fourier:
        return x
    res = [x]
    for i in range(embed_dim):
        for fn in (jnp.sin, jnp.cos):
            res.append(fn((2.0 ** i) * x))
    return jnp.concatenate(res, axis=-1)


if __name__ == "__main__":
    # Small deterministic example: nrays=8, nsamples=16, 3 coords, embed_dim=4.
    nrays, nsamples, embed_dim = 8, 16, 4
    key = jax.random.PRNGKey(0)
    x = jax.random.normal(key, (nrays, nsamples, 3), dtype=jnp.float32)

    ref = fourier_embed_ref(x, embed_dim=embed_dim, fourier=True)

    # Fast path: double-angle recurrence with periodic exact re-anchoring.
    out = jax.block_until_ready(fourier_embed(x, embed_dim=embed_dim, fourier=True))
    assert out.shape == (nrays, nsamples, 3 * (1 + 2 * embed_dim)), out.shape
    assert jnp.max(jnp.abs(out - ref)) < 1e-4, "recurrence mismatch vs reference"

    # Exact per-frequency sin/cos path (tight tolerance).
    out_exact = jax.block_until_ready(
        fourier_embed(x, embed_dim=embed_dim, fourier=True, use_recurrence=False))
    assert jnp.max(jnp.abs(out_exact - ref)) < 1e-5, "exact mode mismatch vs reference"

    # Deeper embedding exercises the re-anchored recurrence (typical NeRF depth).
    x3 = jax.random.normal(jax.random.PRNGKey(0), (32, 64, 3), dtype=jnp.float32)
    out3 = jax.block_until_ready(fourier_embed(x3, embed_dim=8, fourier=True))
    ref3 = fourier_embed_ref(x3, embed_dim=8, fourier=True)
    assert out3.shape == (32, 64, 3 * (1 + 2 * 8)), out3.shape
    assert jnp.max(jnp.abs(out3 - ref3)) < 1e-4, "deep-embed recurrence mismatch"

    # Odd shapes exercise the sample-aligned pad fallback and partial blocks.
    x2 = jax.random.normal(jax.random.PRNGKey(0), (7, 37, 3), dtype=jnp.float32)
    out2 = jax.block_until_ready(fourier_embed(x2, embed_dim=3, fourier=True))
    ref2 = fourier_embed_ref(x2, embed_dim=3, fourier=True)
    assert out2.shape == (7, 37, 3 * (1 + 2 * 3)), out2.shape
    assert jnp.max(jnp.abs(out2 - ref2)) < 1e-4, "odd-shape mismatch vs reference"

    # bf16 output: halves write traffic; compute stays f32 (looser tolerance).
    out_bf16 = jax.block_until_ready(
        fourier_embed(x, embed_dim=embed_dim, fourier=True, out_dtype=jnp.bfloat16))
    assert out_bf16.dtype == jnp.bfloat16
    assert jnp.max(jnp.abs(out_bf16.astype(jnp.float32) - ref)) < 5e-2, "bf16 mismatch"

    # Parts-major fast path (no interleave pass); part 0 == x, part 1 == sin(x).
    out_pm = jax.block_until_ready(
        fourier_embed(x, embed_dim=embed_dim, fourier=True, interleave=False))
    assert out_pm.shape == (1 + 2 * embed_dim, nrays, nsamples, 3), out_pm.shape
    assert jnp.max(jnp.abs(out_pm[0] - x)) < 1e-6
    assert jnp.max(jnp.abs(out_pm[1] - jnp.sin(x))) < 1e-4

    # fourier=False path is a pure passthrough (no kernel launch).
    passthrough = fourier_embed(x, embed_dim=embed_dim, fourier=False)
    assert passthrough.shape == x.shape

    print("KERNEL_OK")
</pallas_src>

<mosaic_0001>
module attributes {stable_mosaic.version = 11 : i64} {
  func.func @_fourier_kernel(%arg0: i32, %arg1: memref<3x128xf32, #tpu.memory_space<vmem>>, %arg2: memref<9x3x128xf32, #tpu.memory_space<vmem>>) attributes {dimension_semantics = [#tpu.dimension_semantics<parallel>], iteration_bounds = array<i64: 1>, scalar_prefetch = 0 : i64, scratch_operands = 0 : i64, tpu.core_type = #tpu.core_type<tc>, window_params = [{transform_indices = @transform_0, window_bounds = array<i64: 3, 128>}, {transform_indices = @transform_1, window_bounds = array<i64: 9, 3, 128>}]} {
    %c0 = arith.constant 0 : index
    %c0_0 = arith.constant 0 : index
    %0 = vector.load %arg1[%c0, %c0_0] : memref<3x128xf32, #tpu.memory_space<vmem>>, vector<3x128xf32>
    %c0_1 = arith.constant 0 : index
    %c0_2 = arith.constant 0 : index
    %c0_3 = arith.constant 0 : index
    %1 = vector.load %arg2[%c0_1, %c0_2, %c0_3] : memref<9x3x128xf32, #tpu.memory_space<vmem>>, vector<1x3x128xf32>
    %2 = vector.shape_cast %1 : vector<1x3x128xf32> to vector<3x128xf32>
    %3 = vector.shape_cast %0 : vector<3x128xf32> to vector<1x3x128xf32>
    tpu.vector_store %arg2[%c0_1, %c0_2, %c0_3], %3 {strides = array<i32>} : memref<9x3x128xf32, #tpu.memory_space<vmem>>, vector<1x3x128xf32>,
    %4 = math.sin %0 : vector<3x128xf32>
    %5 = math.cos %0 : vector<3x128xf32>
    %c1 = arith.constant 1 : index
    %c0_4 = arith.constant 0 : index
    %c0_5 = arith.constant 0 : index
    %6 = vector.load %arg2[%c1, %c0_4, %c0_5] : memref<9x3x128xf32, #tpu.memory_space<vmem>>, vector<1x3x128xf32>
    %7 = vector.shape_cast %6 : vector<1x3x128xf32> to vector<3x128xf32>
    %8 = vector.shape_cast %4 : vector<3x128xf32> to vector<1x3x128xf32>
    tpu.vector_store %arg2[%c1, %c0_4, %c0_5], %8 {strides = array<i32>} : memref<9x3x128xf32, #tpu.memory_space<vmem>>, vector<1x3x128xf32>,
    %c2 = arith.constant 2 : index
    %c0_6 = arith.constant 0 : index
    %c0_7 = arith.constant 0 : index
    %9 = vector.load %arg2[%c2, %c0_6, %c0_7] : memref<9x3x128xf32, #tpu.memory_space<vmem>>, vector<1x3x128xf32>
    %10 = vector.shape_cast %9 : vector<1x3x128xf32> to vector<3x128xf32>
    %11 = vector.shape_cast %5 : vector<3x128xf32> to vector<1x3x128xf32>
    tpu.vector_store %arg2[%c2, %c0_6, %c0_7], %11 {strides = array<i32>} : memref<9x3x128xf32, #tpu.memory_space<vmem>>, vector<1x3x128xf32>,
    %cst = arith.constant 2.000000e+00 : f32
    %12 = vector.broadcast %cst : f32 to vector<3x128xf32>
    %13 = arith.mulf %12, %4 : vector<3x128xf32>
    %14 = arith.mulf %13, %5 : vector<3x128xf32>
    %15 = arith.subf %5, %4 : vector<3x128xf32>
    %16 = arith.addf %5, %4 : vector<3x128xf32>
    %17 = arith.mulf %15, %16 : vector<3x128xf32>
    %c3 = arith.constant 3 : index
    %c0_8 = arith.constant 0 : index
    %c0_9 = arith.constant 0 : index
    %18 = vector.load %arg2[%c3, %c0_8, %c0_9] : memref<9x3x128xf32, #tpu.memory_space<vmem>>, vector<1x3x128xf32>
    %19 = vector.shape_cast %18 : vector<1x3x128xf32> to vector<3x128xf32>
    %20 = vector.shape_cast %14 : vector<3x128xf32> to vector<1x3x128xf32>
    tpu.vector_store %arg2[%c3, %c0_8, %c0_9], %20 {strides = array<i32>} : memref<9x3x128xf32, #tpu.memory_space<vmem>>, vector<1x3x128xf32>,
    %c4 = arith.constant 4 : index
    %c0_10 = arith.constant 0 : index
    %c0_11 = arith.constant 0 : index
    %21 = vector.load %arg2[%c4, %c0_10, %c0_11] : memref<9x3x128xf32, #tpu.memory_space<vmem>>, vector<1x3x128xf32>
    %22 = vector.shape_cast %21 : vector<1x3x128xf32> to vector<3x128xf32>
    %23 = vector.shape_cast %17 : vector<3x128xf32> to vector<1x3x128xf32>
    tpu.vector_store %arg2[%c4, %c0_10, %c0_11], %23 {strides = array<i32>} : memref<9x3x128xf32, #tpu.memory_space<vmem>>, vector<1x3x128xf32>,
    %cst_12 = arith.constant 2.000000e+00 : f32
    %24 = vector.broadcast %cst_12 : f32 to vector<3x128xf32>
    %25 = arith.mulf %24, %14 : vector<3x128xf32>
    %26 = arith.mulf %25, %17 : vector<3x128xf32>
    %27 = arith.subf %17, %14 : vector<3x128xf32>
    %28 = arith.addf %17, %14 : vector<3x128xf32>
    %29 = arith.mulf %27, %28 : vector<3x128xf32>
    %c5 = arith.constant 5 : index
    %c0_13 = arith.constant 0 : index
    %c0_14 = arith.constant 0 : index
    %30 = vector.load %arg2[%c5, %c0_13, %c0_14] : memref<9x3x128xf32, #tpu.memory_space<vmem>>, vector<1x3x128xf32>
    %31 = vector.shape_cast %30 : vector<1x3x128xf32> to vector<3x128xf32>
    %32 = vector.shape_cast %26 : vector<3x128xf32> to vector<1x3x128xf32>
    tpu.vector_store %arg2[%c5, %c0_13, %c0_14], %32 {strides = array<i32>} : memref<9x3x128xf32, #tpu.memory_space<vmem>>, vector<1x3x128xf32>,
    %c6 = arith.constant 6 : index
    %c0_15 = arith.constant 0 : index
    %c0_16 = arith.constant 0 : index
    %33 = vector.load %arg2[%c6, %c0_15, %c0_16] : memref<9x3x128xf32, #tpu.memory_space<vmem>>, vector<1x3x128xf32>
    %34 = vector.shape_cast %33 : vector<1x3x128xf32> to vector<3x128xf32>
    %35 = vector.shape_cast %29 : vector<3x128xf32> to vector<1x3x128xf32>
    tpu.vector_store %arg2[%c6, %c0_15, %c0_16], %35 {strides = array<i32>} : memref<9x3x128xf32, #tpu.memory_space<vmem>>, vector<1x3x128xf32>,
    %cst_17 = arith.constant 2.000000e+00 : f32
    %36 = vector.broadcast %cst_17 : f32 to vector<3x128xf32>
    %37 = arith.mulf %36, %26 : vector<3x128xf32>
    %38 = arith.mulf %37, %29 : vector<3x128xf32>
    %39 = arith.subf %29, %26 : vector<3x128xf32>
    %40 = arith.addf %29, %26 : vector<3x128xf32>
    %41 = arith.mulf %39, %40 : vector<3x128xf32>
    %c7 = arith.constant 7 : index
    %c0_18 = arith.constant 0 : index
    %c0_19 = arith.constant 0 : index
    %42 = vector.load %arg2[%c7, %c0_18, %c0_19] : memref<9x3x128xf32, #tpu.memory_space<vmem>>, vector<1x3x128xf32>
    %43 = vector.shape_cast %42 : vector<1x3x128xf32> to vector<3x128xf32>
    %44 = vector.shape_cast %38 : vector<3x128xf32> to vector<1x3x128xf32>
    tpu.vector_store %arg2[%c7, %c0_18, %c0_19], %44 {strides = array<i32>} : memref<9x3x128xf32, #tpu.memory_space<vmem>>, vector<1x3x128xf32>,
    %c8 = arith.constant 8 : index
    %c0_20 = arith.constant 0 : index
    %c0_21 = arith.constant 0 : index
    %45 = vector.load %arg2[%c8, %c0_20, %c0_21] : memref<9x3x128xf32, #tpu.memory_space<vmem>>, vector<1x3x128xf32>
    %46 = vector.shape_cast %45 : vector<1x3x128xf32> to vector<3x128xf32>
    %47 = vector.shape_cast %41 : vector<3x128xf32> to vector<1x3x128xf32>
    tpu.vector_store %arg2[%c8, %c0_20, %c0_21], %47 {strides = array<i32>} : memref<9x3x128xf32, #tpu.memory_space<vmem>>, vector<1x3x128xf32>,
    return
  }
  func.func @transform_0(%arg0: i32) -> (i32, i32) {
    %c0_i32 = arith.constant 0 : i32
    %c0_i32_0 = arith.constant 0 : i32
    return %arg0, %c0_i32 : i32, i32
  }
  func.func @transform_1(%arg0: i32) -> (i32, i32, i32) {
    %c0_i32 = arith.constant 0 : i32
    %c0_i32_0 = arith.constant 0 : i32
    %c0_i32_1 = arith.constant 0 : i32
    return %c0_i32, %arg0, %c0_i32_0 : i32, i32, i32
  }
}

</mosaic_0001>

<llo_original>
// kernel: _fourier_embed_impl.1
$region0: #{_fourier_embed_impl.1}
  #allocation0 [shape = 'u32[]', space=smem, size = 0x4, offset = 0x4, fixed_abs, tag = 'smem constant byte address 0x4 - core index']
  #allocation1 [shape = 'u32[144,128]{1,0:T(1,128)}', space=vmem, size = 0x12000, scoped, tag = 'internal scratch']
  %s0 = inlined_call_operand.vmem [shape: f32[3,128], index: 0, kind: input, shape index: {}]
  %s1 = inlined_call_operand.vmem [shape: f32[9,3,128], index: 1, kind: output, shape index: {}]
  %s2 = sld [smem:[#allocation0]]
  $region14: #{_fourier_embed_impl.1} parent=0
    _
  %s4 = ssub.s32 1, %s2
  %s5 = scalar_select 0, %s4, %s2
  // Predicated region
  $region2: #{_fourier_embed_impl.1} parent=0 // pred_check
    _
  $region3: #{_fourier_embed_impl.1} parent=0 // pred_check_branch
    %7 = sbr.rel (0) target = $region5
  $region4: #{_fourier_embed_impl.1} parent=0 // pred_region
    _
  $region5: #{_fourier_embed_impl.1} parent=0 // pred_fallthru
    _
  %v8 = vld [vmem:[%s0] sm:$0x7]
  %9 = vst [vmem:[%s1] sm:$0x7] %v8
  %v10 = vand.u32 2147483647, %v8
  %vm11 = vcmp.le.f32.partialorder %v10, 0.7853982
  %vm12 = vcmp.lt.s32.totalorder %v8, 0
  %v13 = vand.u32 %v8, 2139095040
  %v14 = vshrl.u32 %v13, 23
  %v15 = vsub.s32 %v14, 127
  %v16 = vand.u32 2147483647, %v8
  %v17 = vand.u32 %v16, 8388607
  %v18 = vor.u32 %v17, 8388608
  %v19 = vsub.s32 0, %v18
  %v20 = vadd.s32 %v15, 1
  %vm21 = vcmp.gt.s32.totalorder %v20, 0
  %v22 = vsel %vm21, %v20, 0
  %v23 = vshrl.u32 %v22, 5
  %v24 = vand.u32 %v22, 31
  %v25 = vsub.s32 32, %v24
  %v26 = vshrl.u32 683565275, %v25
  %v27 = vshll.u32 683565275, %v24
  %v28 = vshrl.u32 2475754826, %v25
  %v29 = vor.u32 %v27, %v28
  %v30 = vshll.u32 2475754826, %v24
  %v31 = vshrl.u32 2131351028, %v25
  %v32 = vor.u32 %v30, %v31
  %v33 = vshll.u32 2131351028, %v24
  %v34 = vshrl.u32 2102212464, %v25
  %v35 = vor.u32 %v33, %v34
  %v36 = vshll.u32 2102212464, %v24
  %v37 = vshrl.u32 920167782, %v25
  %v38 = vor.u32 %v36, %v37
  %v39 = vshll.u32 920167782, %v24
  %v40 = vshrl.u32 1326507024, %v25
  %v41 = vor.u32 %v39, %v40
  %vm42 = vcmp.lt.s32.totalorder %v23, 1
  %vm43 = vcmp.lt.s32.totalorder %v23, 2
  %vm44 = vcmp.lt.s32.totalorder %v23, 3
  %vm45 = vcmp.lt.s32.totalorder %v23, 4
  %v46 = vsel %vm42, %v26, %v29
  %v47 = vsel %vm45, %v35, 2102212464
  %v48 = vsel %vm44, %v32, %v47
  %v49 = vsel %vm43, %v46, %v48
  %v50 = vsel %vm42, %v29, %v32
  %v51 = vsel %vm45, %v38, 920167782
  %v52 = vsel %vm44, %v35, %v51
  %v53 = vsel %vm43, %v50, %v52
  %v54 = vsel %vm42, %v32, %v35
  %v55 = vsel %vm45, %v41, 1326507024
  %v56 = vsel %vm44, %v38, %v55
  %v57 = vsel %vm43, %v54, %v56
  %v58 = vshll.u32 %v18, 8
  %v59 = vmul.u32.u64.compose %v58, %v57
  %v60 = vextract.low.u32 %v59
  %v61 = vextract.high.u32 %v59
  %v62 = vmul.u32.u64.compose %v58, %v53
  %v63 = vextract.low.u32 %v62
  %v64 = vextract.high.u32 %v62
  %v65 = vmul.u32 %v58, %v49
  %v66 = vadd.s32 %v61, %v63
  %vm67 = vc.u32 %v61, %v63
  %v68 = vadd.s32 %v64, 1
  %v69 = vsel %vm67, %v68, %v64
  %v70 = vadd.s32 %v65, %v69
  %v71 = vadd.s32 %v70, 536870912
  %v72 = vshrl.u32 %v71, 30
  %v73 = vshll.u32 %v72, 30
  %v74 = vsub.s32 %v70, %v73
  %vm75 = vcmp.lt.s32.totalorder %v74, 0
  %v76 = vsub.s32 0, %v74
  %v77 = vsel %vm75, %v76, %v74
  %v78 = vclz %v77
  %v79 = vsub.s32 %v78, 2
  %vm80 = vcmp.gt.s32.totalorder 0, %v79
  %v81 = vsel %vm80, 0, %v79
  %v82 = vsub.s32 32, %v81
  %v83 = vshll.u32 %v74, %v81
  %v84 = vshrl.u32 %v66, %v82
  %v85 = vor.u32 %v83, %v84
  %v86 = vsub.s32 4294967266, %v81
  %v87 = vadd.s32 %v86, 127
  %v88 = vshll.u32 %v87, 23
  %v89 = vor.u32 4788187, %v88
  %v90 = vand.u32 2147483647, %v89
  %v92 = vcvt.s32.f32 %v85
  %v93 = vmul.f32 %v92, %v90
  %v94 = vxor.u32 %v93, 2147483648
  %v95 = vsel %vm12, %v94, %v93
  %v96 = vsub.s32 4, %v72
  %v97 = vsel %vm12, %v96, %v72
  %v98 = vsel %vm11, %v8, %v95
  %v99 = vsel %vm11, 0, %v97
  %v100 = vcosq.f32.pop %v98
  %v101 = vsinq.f32.pop %v98
  %vm102 = vweird.f32 %v8
  %v103 = vadd.s32 %v99, 3
  %v104 = vand.u32 %v103, 3
  %vm105 = vcmp.lt.s32.totalorder %v104, 2
  %vm106 = vcmp.eq.s32.totalorder %v104, 0
  %v107 = vxor.u32 %v101, 2147483648
  %v108 = vsel %vm106, %v100, %v107
  %vm109 = vcmp.eq.s32.totalorder %v104, 2
  %v110 = vxor.u32 %v100, 2147483648
  %v111 = vsel %vm109, %v110, %v101
  %v112 = vsel %vm105, %v108, %v111
  %v113 = vsel %vm102, nan, %v112
  %v114 = vand.u32 2147483647, %v8
  %vm115 = vcmp.le.f32.partialorder %v114, 0.7853982
  %vm116 = vcmp.lt.s32.totalorder %v8, 0
  %v117 = vand.u32 %v8, 2139095040
  %v118 = vshrl.u32 %v117, 23
  %v119 = vsub.s32 %v118, 127
  %v120 = vand.u32 2147483647, %v8
  %v121 = vand.u32 %v120, 8388607
  %v122 = vor.u32 %v121, 8388608
  %v123 = vsub.s32 0, %v122
  %v124 = vadd.s32 %v119, 1
  %vm125 = vcmp.gt.s32.totalorder %v124, 0
  %v126 = vsel %vm125, %v124, 0
  %v127 = vshrl.u32 %v126, 5
  %v128 = vand.u32 %v126, 31
  %v129 = vsub.s32 32, %v128
  %v130 = vshrl.u32 683565275, %v129
  %v131 = vshll.u32 683565275, %v128
  %v132 = vshrl.u32 2475754826, %v129
  %v133 = vor.u32 %v131, %v132
  %v134 = vshll.u32 2475754826, %v128
  %v135 = vshrl.u32 2131351028, %v129
  %v136 = vor.u32 %v134, %v135
  %v137 = vshll.u32 2131351028, %v128
  %v138 = vshrl.u32 2102212464, %v129
  %v139 = vor.u32 %v137, %v138
  %v140 = vshll.u32 2102212464, %v128
  %v141 = vshrl.u32 920167782, %v129
  %v142 = vor.u32 %v140, %v141
  %v143 = vshll.u32 920167782, %v128
  %v144 = vshrl.u32 1326507024, %v129
  %v145 = vor.u32 %v143, %v144
  %vm146 = vcmp.lt.s32.totalorder %v127, 1
  %vm147 = vcmp.lt.s32.totalorder %v127, 2
  %vm148 = vcmp.lt.s32.totalorder %v127, 3
  %vm149 = vcmp.lt.s32.totalorder %v127, 4
  %v150 = vsel %vm146, %v130, %v133
  %v151 = vsel %vm149, %v139, 2102212464
  %v152 = vsel %vm148, %v136, %v151
  %v153 = vsel %vm147, %v150, %v152
  %v154 = vsel %vm146, %v133, %v136
  %v155 = vsel %vm149, %v142, 920167782
  %v156 = vsel %vm148, %v139, %v155
  %v157 = vsel %vm147, %v154, %v156
  %v158 = vsel %vm146, %v136, %v139
  %v159 = vsel %vm149, %v145, 1326507024
  %v160 = vsel %vm148, %v142, %v159
  %v161 = vsel %vm147, %v158, %v160
  %v162 = vshll.u32 %v122, 8
  %v163 = vmul.u32.u64.compose %v162, %v161
  %v164 = vextract.low.u32 %v163
  %v165 = vextract.high.u32 %v163
  %v166 = vmul.u32.u64.compose %v162, %v157
  %v167 = vextract.low.u32 %v166
  %v168 = vextract.high.u32 %v166
  %v169 = vmul.u32 %v162, %v153
  %v170 = vadd.s32 %v165, %v167
  %vm171 = vc.u32 %v165, %v167
  %v172 = vadd.s32 %v168, 1
  %v173 = vsel %vm171, %v172, %v168
  %v174 = vadd.s32 %v169, %v173
  %v175 = vadd.s32 %v174, 536870912
  %v176 = vshrl.u32 %v175, 30
  %v177 = vshll.u32 %v176, 30
  %v178 = vsub.s32 %v174, %v177
  %vm179 = vcmp.lt.s32.totalorder %v178, 0
  %v180 = vsub.s32 0, %v178
  %v181 = vsel %vm179, %v180, %v178
  %v182 = vclz %v181
  %v183 = vsub.s32 %v182, 2
  %vm184 = vcmp.gt.s32.totalorder 0, %v183
  %v185 = vsel %vm184, 0, %v183
  %v186 = vsub.s32 32, %v185
  %v187 = vshll.u32 %v178, %v185
  %v188 = vshrl.u32 %v170, %v186
  %v189 = vor.u32 %v187, %v188
  %v190 = vsub.s32 4294967266, %v185
  %v191 = vadd.s32 %v190, 127
  %v192 = vshll.u32 %v191, 23
  %v193 = vor.u32 4788187, %v192
  %v194 = vand.u32 2147483647, %v193
  %v196 = vcvt.s32.f32 %v189
  %v197 = vmul.f32 %v196, %v194
  %v198 = vxor.u32 %v197, 2147483648
  %v199 = vsel %vm116, %v198, %v197
  %v200 = vsub.s32 4, %v176
  %v201 = vsel %vm116, %v200, %v176
  %v202 = vsel %vm115, %v8, %v199
  %v203 = vsel %vm115, 0, %v201
  %v204 = vcosq.f32.pop %v202
  %v205 = vsinq.f32.pop %v202
  %vm206 = vweird.f32 %v8
  %v207 = vand.u32 %v203, 3
  %vm208 = vcmp.lt.s32.totalorder %v207, 2
  %vm209 = vcmp.eq.s32.totalorder %v207, 0
  %v210 = vxor.u32 %v205, 2147483648
  %v211 = vsel %vm209, %v204, %v210
  %vm212 = vcmp.eq.s32.totalorder %v207, 2
  %v213 = vxor.u32 %v204, 2147483648
  %v214 = vsel %vm212, %v213, %v205
  %v215 = vsel %vm208, %v211, %v214
  %v216 = vsel %vm206, nan, %v215
  %s217 = scalar_lea.vmem %s1, 4
  %218 = vst [vmem:[%s217] sm:$0x7] %v113
  %s219 = scalar_lea.vmem %s1, 8
  %220 = vst [vmem:[%s219] sm:$0x7] %v216
  %v221 = vmul.f32 %v113, 2.0
  %v222 = vmul.f32 %v221, %v216
  %v223 = vsub.f32 %v216, %v113
  %v224 = vadd.f32 %v216, %v113
  %v225 = vmul.f32 %v223, %v224
  %s226 = scalar_lea.vmem %s1, 12
  %227 = vst [vmem:[%s226] sm:$0x7] %v222
  %s228 = scalar_lea.vmem %s1, 16
  %229 = vst [vmem:[%s228] sm:$0x7] %v225
  %v230 = vmul.f32 %v222, 2.0
  %v231 = vmul.f32 %v230, %v225
  %v232 = vsub.f32 %v225, %v222
  %v233 = vadd.f32 %v225, %v222
  %v234 = vmul.f32 %v232, %v233
  %s235 = scalar_lea.vmem %s1, 20
  %236 = vst [vmem:[%s235] sm:$0x7] %v231
  %s237 = scalar_lea.vmem %s1, 24
  %238 = vst [vmem:[%s237] sm:$0x7] %v234
  %v239 = vmul.f32 %v231, 2.0
  %v240 = vmul.f32 %v239, %v234
  %v241 = vsub.f32 %v234, %v231
  %v242 = vadd.f32 %v234, %v231
  %v243 = vmul.f32 %v241, %v242
  %s244 = scalar_lea.vmem %s1, 28
  %245 = vst [vmem:[%s244] sm:$0x7] %v240
  %s246 = scalar_lea.vmem %s1, 32
  %247 = vst [vmem:[%s246] sm:$0x7] %v243
  // Predicated region
  $region6: #{_fourier_embed_impl.1} parent=0 // pred_check
    _
  $region7: #{_fourier_embed_impl.1} parent=0 // pred_check_branch
    %249 = sbr.rel (0) target = $region9
  $region8: #{_fourier_embed_impl.1} parent=0 // pred_region
    _
  $region9: #{_fourier_embed_impl.1} parent=0 // pred_fallthru
    _
  // Predicated region
  $region10: #{_fourier_embed_impl.1} parent=0 // pred_check
    _
  $region11: #{_fourier_embed_impl.1} parent=0 // pred_check_branch
    %251 = sbr.rel (0) target = $region13
  $region12: #{_fourier_embed_impl.1} parent=0 // pred_region
    _
  $region13: #{_fourier_embed_impl.1} parent=0 // pred_fallthru
    _

</llo_original>
